<compile_context>
chip_gen: v6e
topology: v6e:2x2x1
jax: 0.10.0
libtpu: 0.0.40
codegen_flags: <defaults>
</compile_context>

<pallas_src>
import functools

import jax
import jax.numpy as jnp
from jax.experimental import pallas as pl
from jax.experimental.pallas import tpu as pltpu


def _round_up(x, m):
    return ((x + m - 1) // m) * m


# --------------------------------------------------------------------------
# Stage 1: fused KV projection + head split (runs exactly once per kv tile).
# --------------------------------------------------------------------------
def _kv_proj_kernel(xkv_ref, wkv_ref, bkv_ref, k_ref, v_ref,
                    *, emb_size, num_heads):
    """One (batch, kv-tile) grid step.

    Block shapes:
      xkv_ref : (1, Tk, E)      bf16
      wkv_ref : (E, 2E)         bf16      bkv_ref : (1, 2E) f32
      k_ref   : (1, H, Tk, Dh)  bf16      v_ref   : (1, H, Tk, Dh) bf16
    """
    E = emb_size
    H = num_heads
    Dh = E // H
    Tk = xkv_ref.shape[1]

    kv = jnp.dot(xkv_ref[0], wkv_ref[...],
                 preferred_element_type=jnp.float32) + bkv_ref[0]   # (Tk, 2E)
    # Head split happens here, once per kv tile (not once per (q-tile, kv-tile)).
    k_ref[0] = jnp.transpose(kv[:, :E].reshape(Tk, H, Dh), (1, 0, 2)).astype(jnp.bfloat16)
    v_ref[0] = jnp.transpose(kv[:, E:].reshape(Tk, H, Dh), (1, 0, 2)).astype(jnp.bfloat16)


# --------------------------------------------------------------------------
# Stage 2: flash attention (online softmax) + out proj + residual + post-LN.
# --------------------------------------------------------------------------
def _flash_mha_kernel(q_ref, k_ref, v_ref, mask_ref,
                      wq_ref, bq_ref, wout_ref, bout_ref,
                      g_pre_ref, b_pre_ref, g_post_ref, b_post_ref,
                      o_ref,
                      q_scratch, m_scratch, l_scratch, acc_scratch,
                      *, emb_size, num_heads, eps):
    """One (batch, q-tile, kv-tile) grid step.

    Block shapes:
      q_ref    : (1, Tq, E)     f32 (also used for the residual)
      k_ref/v_ref : (1, H, Tk, Dh) bf16 (pre-projected, head-split)
      mask_ref : (1, Tq, Tk)    int8 (1 = masked)
      wq/wout  : (E, E) bf16    biases / LN params : (1, E) f32
      o_ref    : (1, Tq, E)
    Scratch (persists across the kv-tile axis):
      q_scratch   : (H, Tq, Dh) bf16   scaled per-head Q
      m_scratch   : (H, Tq, 1)  f32    running max
      l_scratch   : (H, Tq, 1)  f32    running denom
      acc_scratch : (H, Tq, Dh) f32    context accumulator
    """
    E = emb_size
    H = num_heads
    Dh = E // H
    Tq = q_ref.shape[1]
    inv_norm = jnp.float32(1.0 / ((E / H) ** 0.5))
    neg_big = jnp.float32(-1e30)

    ki = pl.program_id(2)
    nk = pl.num_programs(2)

    # ---- once per (batch, q-tile): pre-LN + Q projection, init softmax state
    @pl.when(ki == 0)
    def _init():
        x_q = q_ref[0].astype(jnp.float32)                          # (Tq, E)
        mu = jnp.mean(x_q, axis=-1, keepdims=True)
        var = jnp.mean((x_q - mu) ** 2, axis=-1, keepdims=True)
        norm_q = (x_q - mu) * jax.lax.rsqrt(var + eps) * g_pre_ref[0] + b_pre_ref[0]
        qp = jnp.dot(norm_q.astype(jnp.bfloat16), wq_ref[...],
                     preferred_element_type=jnp.float32) + bq_ref[0]
        qp = qp * inv_norm                                          # fold 1/sqrt(E/H)
        q_scratch[...] = jnp.transpose(qp.reshape(Tq, H, Dh), (1, 0, 2)).astype(jnp.bfloat16)
        m_scratch[...] = jnp.full_like(m_scratch, -1e30)
        l_scratch[...] = jnp.zeros_like(l_scratch)
        acc_scratch[...] = jnp.zeros_like(acc_scratch)

    # ---- per K/V tile: online-softmax update --------------------------------
    neg_bias = mask_ref[0].astype(jnp.float32) * neg_big            # (Tq, Tk)
    s = jnp.einsum('hqd,hkd->hqk', q_scratch[...], k_ref[0],
                   preferred_element_type=jnp.float32) + neg_bias[None]  # (H,Tq,Tk)

    m_prev = m_scratch[...]
    m_new = jnp.maximum(m_prev, jnp.max(s, axis=-1, keepdims=True))
    alpha = jnp.exp(m_prev - m_new)
    p = jnp.exp(s - m_new).astype(jnp.bfloat16)                     # exp -> bf16, one pass
    l_scratch[...] = alpha * l_scratch[...] + jnp.sum(
        p, axis=-1, keepdims=True, dtype=jnp.float32)               # f32 accumulation
    acc_scratch[...] = alpha * acc_scratch[...] + jnp.einsum(
        'hqk,hkd->hqd', p, v_ref[0], preferred_element_type=jnp.float32)
    m_scratch[...] = m_new

    # ---- finalize: normalize context, output proj, residual, post-LN --------
    @pl.when(ki == nk - 1)
    def _finalize():
        ctx = acc_scratch[...] * pl.reciprocal(l_scratch[...], approx=True)
        ctx = jnp.transpose(ctx, (1, 0, 2)).reshape(Tq, E)          # (Tq, E)
        out = jnp.dot(ctx.astype(jnp.bfloat16), wout_ref[...],
                      preferred_element_type=jnp.float32) + bout_ref[0]
        res = out + q_ref[0].astype(jnp.float32)                    # residual
        mu2 = jnp.mean(res, axis=-1, keepdims=True)
        var2 = jnp.mean((res - mu2) ** 2, axis=-1, keepdims=True)
        y = (res - mu2) * jax.lax.rsqrt(var2 + eps) * g_post_ref[0] + b_post_ref[0]
        o_ref[0] = y.astype(o_ref.dtype)


def multihead_attention2(input_q, input_kv, input_mask, params,
                         *, emb_size, num_heads, eps=1e-6):
    """input_q: (B, Lq, E), input_kv: (B, Lk, E), input_mask: (B, Lq, Lk) bool.

    Mask semantics follow the PyTorch module: True = masked.  Fully-masked
    query rows produce a finite (roughly uniform) softmax rather than NaN.
    """
    B, Lq, E = input_q.shape
    Lk = input_kv.shape[1]
    assert E == emb_size and E % num_heads == 0
    H = num_heads
    Dh = E // H
    out_dtype = input_q.dtype

    # Tiles: Tq/Tk = 256 keeps the 256x256 MXU on v6e/v7x filled while the
    # (H,Tq,Tk) intermediates + double-buffered blocks fit v7x's 64 MiB VMEM.
    # Awkward lengths are padded up to the tile instead of shrinking tiles.
    Tq = 256 if Lq >= 256 else _round_up(Lq, 8)
    Tk = 256 if Lk >= 256 else _round_up(Lk, 8)
    Lq_p = _round_up(Lq, Tq)
    Lk_p = _round_up(Lk, Tk)
    nq, nk = Lq_p // Tq, Lk_p // Tk

    if Lq_p != Lq:
        input_q = jnp.pad(input_q, ((0, 0), (0, Lq_p - Lq), (0, 0)))
    x_kv = input_kv.astype(jnp.bfloat16)        # bf16 KV stream (lossless vs prev code)
    if Lk_p != Lk:
        x_kv = jnp.pad(x_kv, ((0, 0), (0, Lk_p - Lk), (0, 0)))

    # int8 mask (1 = masked); padded keys are masked, padded query rows are
    # computed with an all-False mask and simply discarded at the end.
    mask = input_mask
    if Lk_p != Lk:
        mask = jnp.pad(mask, ((0, 0), (0, 0), (0, Lk_p - Lk)), constant_values=True)
    if Lq_p != Lq:
        mask = jnp.pad(mask, ((0, 0), (0, Lq_p - Lq), (0, 0)), constant_values=False)
    mask_i8 = mask.astype(jnp.int8)

    # MXU-facing weights in bf16 (f32 accumulation inside the kernels).
    wq = params["linear_q_weight"].astype(jnp.bfloat16)
    wkv = params["linear_kv_weight"].astype(jnp.bfloat16)
    wout = params["linear_out_weight"].astype(jnp.bfloat16)
    bq = params["linear_q_bias"].reshape(1, E).astype(jnp.float32)
    bkv = params["linear_kv_bias"].reshape(1, 2 * E).astype(jnp.float32)
    bout = params["linear_out_bias"].reshape(1, E).astype(jnp.float32)
    g_pre = params["ln_pre_gamma"].reshape(1, E).astype(jnp.float32)
    b_pre = params["ln_pre_beta"].reshape(1, E).astype(jnp.float32)
    g_post = params["ln_post_gamma"].reshape(1, E).astype(jnp.float32)
    b_post = params["ln_post_beta"].reshape(1, E).astype(jnp.float32)

    # ---- stage 1: KV projection + head split (once per kv tile, not per q-tile)
    kv_cost = pl.CostEstimate(
        flops=int(2 * B * Lk_p * E * 2 * E),
        transcendentals=0,
        bytes_accessed=int(2 * B * Lk_p * E          # x_kv bf16 in
                           + 2 * E * 2 * E + 4 * 2 * E
                           + 2 * 2 * B * Lk_p * E))  # K,V bf16 out
    k_heads, v_heads = pl.pallas_call(
        functools.partial(_kv_proj_kernel, emb_size=E, num_heads=H),
        out_shape=(jax.ShapeDtypeStruct((B, H, Lk_p, Dh), jnp.bfloat16),
                   jax.ShapeDtypeStruct((B, H, Lk_p, Dh), jnp.bfloat16)),
        grid_spec=pltpu.PrefetchScalarGridSpec(
            num_scalar_prefetch=0,
            grid=(B, nk),
            in_specs=[
                pl.BlockSpec((1, Tk, E), lambda b, k: (b, k, 0)),
                pl.BlockSpec((E, 2 * E), lambda b, k: (0, 0)),
                pl.BlockSpec((1, 2 * E), lambda b, k: (0, 0)),
            ],
            out_specs=[
                pl.BlockSpec((1, H, Tk, Dh), lambda b, k: (b, 0, k, 0)),
                pl.BlockSpec((1, H, Tk, Dh), lambda b, k: (b, 0, k, 0)),
            ]),
        compiler_params=pltpu.CompilerParams(
            dimension_semantics=("parallel", "parallel"),
            vmem_limit_bytes=40 * 1024 * 1024),
        cost_estimate=kv_cost,
    )(x_kv, wkv, bkv)

    # ---- stage 2: flash attention + output projection + residual + post-LN --
    attn_cost = pl.CostEstimate(
        flops=int(2 * B * Lq_p * E * E                   # Q projection
                  + 4 * B * H * Lq_p * Lk_p * Dh         # QK^T + PV
                  + 2 * B * Lq_p * E * E),               # output projection
        transcendentals=int(B * H * Lq_p * Lk_p),
        bytes_accessed=int(4 * B * Lq_p * E              # input_q f32 (read once per q-tile)
                           + 2 * 2 * B * Lk_p * E * nq   # K,V bf16, re-streamed per q-tile
                           + B * Lq_p * Lk_p             # int8 mask
                           + 2 * (2 * E * E)             # Wq + Wout bf16
                           + 4 * B * Lq_p * E))          # output f32

    q_map = lambda b, qi, ki: (b, qi, 0)
    kv_map = lambda b, qi, ki: (b, 0, ki, 0)
    mask_map = lambda b, qi, ki: (b, qi, ki)
    const2d = lambda b, qi, ki: (0, 0)

    out_padded = pl.pallas_call(
        functools.partial(_flash_mha_kernel, emb_size=E, num_heads=H, eps=eps),
        out_shape=jax.ShapeDtypeStruct((B, Lq_p, E), out_dtype),
        grid_spec=pltpu.PrefetchScalarGridSpec(
            num_scalar_prefetch=0,
            grid=(B, nq, nk),
            in_specs=[
                pl.BlockSpec((1, Tq, E), q_map),           # input_q (f32)
                pl.BlockSpec((1, H, Tk, Dh), kv_map),      # K heads (bf16)
                pl.BlockSpec((1, H, Tk, Dh), kv_map),      # V heads (bf16)
                pl.BlockSpec((1, Tq, Tk), mask_map),       # mask (int8)
                pl.BlockSpec((E, E), const2d),             # Wq (bf16)
                pl.BlockSpec((1, E), const2d),             # bq
                pl.BlockSpec((E, E), const2d),             # Wout (bf16)
                pl.BlockSpec((1, E), const2d),             # bout
                pl.BlockSpec((1, E), const2d),             # ln_pre gamma
                pl.BlockSpec((1, E), const2d),             # ln_pre beta
                pl.BlockSpec((1, E), const2d),             # ln_post gamma
                pl.BlockSpec((1, E), const2d),             # ln_post beta
            ],
            out_specs=pl.BlockSpec((1, Tq, E), q_map),
            scratch_shapes=[
                pltpu.VMEM((H, Tq, Dh), jnp.bfloat16),     # scaled Q heads
                pltpu.VMEM((H, Tq, 1), jnp.float32),       # running max m
                pltpu.VMEM((H, Tq, 1), jnp.float32),       # running denom l
                pltpu.VMEM((H, Tq, Dh), jnp.float32),      # context accumulator
            ]),
        compiler_params=pltpu.CompilerParams(
            dimension_semantics=("parallel", "parallel", "arbitrary"),
            vmem_limit_bytes=40 * 1024 * 1024),
        cost_estimate=attn_cost,
    )(input_q, k_heads, v_heads, mask_i8,
      wq, bq, wout, bout, g_pre, b_pre, g_post, b_post)

    return out_padded[:, :Lq, :] if Lq_p != Lq else out_padded


def _reference(input_q, input_kv, input_mask, params, *, emb_size, num_heads, eps=1e-6):
    """Pure-JAX f32 mirror of the PyTorch forward (eval mode)."""
    E, H = emb_size, num_heads
    B, Lq, _ = input_q.shape
    Lk = input_kv.shape[1]
    Dh = E // H

    def ln(x, g, b):
        mu = jnp.mean(x, axis=-1, keepdims=True)
        var = jnp.mean((x - mu) ** 2, axis=-1, keepdims=True)
        return (x - mu) / jnp.sqrt(var + eps) * g + b

    nq = ln(input_q, params["ln_pre_gamma"], params["ln_pre_beta"])
    q = nq @ params["linear_q_weight"] + params["linear_q_bias"]
    kv = input_kv @ params["linear_kv_weight"] + params["linear_kv_bias"]
    k, v = kv[..., :E], kv[..., E:]

    q = q.reshape(B, Lq, H, Dh).transpose(0, 2, 1, 3)
    k = k.reshape(B, Lk, H, Dh).transpose(0, 2, 1, 3)
    v = v.reshape(B, Lk, H, Dh).transpose(0, 2, 1, 3)

    s = jnp.einsum("bhqd,bhkd->bhqk", q, k) / ((E / H) ** 0.5)
    s = jnp.where(input_mask[:, None, :, :], -jnp.inf, s)
    p = jax.nn.softmax(s, axis=-1)
    ctx = jnp.einsum("bhqk,bhkd->bhqd", p, v).transpose(0, 2, 1, 3).reshape(B, Lq, E)
    out = ctx @ params["linear_out_weight"] + params["linear_out_bias"]
    return ln(out + input_q, params["ln_post_gamma"], params["ln_post_beta"])


if __name__ == "__main__":
    # Small shapes consistent with the module's forward; Lq/Lk deliberately not
    # multiples of 8 so the padding path is exercised.
    B, Lq, Lk, E, H = 2, 12, 20, 32, 4

    key = jax.random.PRNGKey(0)
    keys = jax.random.split(key, 10)

    # Deterministic parameter init mirroring init_parameters().
    b_kv_w = (2.0 / E) ** 0.5
    b_kv_b = (1.5 / E) ** 0.5
    b_q = (3.0 / E) ** 0.5
    params = {
        "linear_q_weight":  jax.random.uniform(keys[0], (E, E), jnp.float32, -b_q, b_q),
        "linear_q_bias":    jax.random.uniform(keys[1], (E,), jnp.float32, -b_q, b_q),
        "linear_kv_weight": jax.random.uniform(keys[2], (E, 2 * E), jnp.float32, -b_kv_w, b_kv_w),
        "linear_kv_bias":   jax.random.uniform(keys[3], (2 * E,), jnp.float32, -b_kv_b, b_kv_b),
        "linear_out_weight": jax.random.uniform(keys[4], (E, E), jnp.float32, -b_q, b_q),
        "linear_out_bias":   jax.random.uniform(keys[5], (E,), jnp.float32, -b_q, b_q),
        "ln_pre_gamma":  jnp.ones((E,), jnp.float32),
        "ln_pre_beta":   jnp.zeros((E,), jnp.float32),
        "ln_post_gamma": jnp.ones((E,), jnp.float32),
        "ln_post_beta":  jnp.zeros((E,), jnp.float32),
    }

    input_q = jax.random.normal(keys[6], (B, Lq, E), jnp.float32)
    input_kv = jax.random.normal(keys[7], (B, Lk, E), jnp.float32)
    # Boolean mask (True = masked); keep at least one unmasked key per query
    # row so the reference's -inf softmax is well defined.
    input_mask = jax.random.bernoulli(keys[8], p=0.3, shape=(B, Lq, Lk))
    input_mask = input_mask.at[:, :, 0].set(False)

    out = multihead_attention2(input_q, input_kv, input_mask, params,
                               emb_size=E, num_heads=H)
    out = jax.block_until_ready(out)

    ref = _reference(input_q, input_kv, input_mask, params, emb_size=E, num_heads=H)
    assert out.shape == (B, Lq, E)
    # bf16 MXU inputs / bf16 probabilities + approx softmax reciprocal vs f32 ref.
    assert jnp.allclose(out, ref, atol=5e-2, rtol=5e-2), "mismatch vs reference"

    print("KERNEL_OK")
</pallas_src>

<mosaic_0001>
module attributes {stable_mosaic.version = 11 : i64} {
  func.func @_kv_proj_kernel(%arg0: i32, %arg1: i32, %arg2: memref<1x24x32xbf16, #tpu.memory_space<vmem>>, %arg3: memref<32x64xbf16, #tpu.memory_space<vmem>>, %arg4: memref<1x64xf32, #tpu.memory_space<vmem>>, %arg5: memref<1x4x24x8xbf16, #tpu.memory_space<vmem>>, %arg6: memref<1x4x24x8xbf16, #tpu.memory_space<vmem>>) attributes {dimension_semantics = [#tpu.dimension_semantics<parallel>, #tpu.dimension_semantics<parallel>], iteration_bounds = array<i64: 2, 1>, scalar_prefetch = 0 : i64, scratch_operands = 0 : i64, tpu.core_type = #tpu.core_type<tc>, window_params = [{transform_indices = @transform_0, window_bounds = array<i64: 1, 24, 32>}, {pipeline_mode = #tpu.pipeline_mode<synchronous>, transform_indices = @transform_1, window_bounds = array<i64: 32, 64>}, {pipeline_mode = #tpu.pipeline_mode<synchronous>, transform_indices = @transform_2, window_bounds = array<i64: 1, 64>}, {transform_indices = @transform_3, window_bounds = array<i64: 1, 4, 24, 8>}, {transform_indices = @transform_4, window_bounds = array<i64: 1, 4, 24, 8>}]} {
    %c0 = arith.constant 0 : index
    %c0_0 = arith.constant 0 : index
    %c0_1 = arith.constant 0 : index
    %0 = vector.load %arg2[%c0, %c0_0, %c0_1] : memref<1x24x32xbf16, #tpu.memory_space<vmem>>, vector<1x24x32xbf16>
    %1 = vector.shape_cast %0 : vector<1x24x32xbf16> to vector<24x32xbf16>
    %c0_2 = arith.constant 0 : index
    %c0_3 = arith.constant 0 : index
    %2 = vector.load %arg3[%c0_2, %c0_3] : memref<32x64xbf16, #tpu.memory_space<vmem>>, vector<32x64xbf16>
    %cst = arith.constant dense<0.000000e+00> : vector<24x64xf32>
    %3 = tpu.matmul %1, %2, %cst {dimension_numbers = #tpu.dot_dimension_numbers<[1], [0], [0], [1], [0, 0, 1, 1], [], []>} : vector<24x32xbf16>, vector<32x64xbf16>, vector<24x64xf32> -> vector<24x64xf32>
    %c0_4 = arith.constant 0 : index
    %c0_5 = arith.constant 0 : index
    %4 = vector.load %arg4[%c0_4, %c0_5] : memref<1x64xf32, #tpu.memory_space<vmem>>, vector<1x64xf32>
    %5 = vector.shape_cast %4 : vector<1x64xf32> to vector<64xf32>
    %6 = vector.shape_cast %5 : vector<64xf32> to vector<1x64xf32>
    %7 = vector.broadcast %6 : vector<1x64xf32> to vector<24x64xf32>
    %8 = arith.addf %3, %7 : vector<24x64xf32>
    %9 = vector.extract_strided_slice %8 {offsets = [0, 0], sizes = [24, 32], strides = [1, 1]} : vector<24x64xf32> to vector<24x32xf32>
    %10 = vector.shape_cast %9 : vector<24x32xf32> to vector<24x4x8xf32>
    %11 = tpu.transpose %10, [1, 0, 2] : vector<24x4x8xf32> -> vector<4x24x8xf32>
    %12 = arith.truncf %11 : vector<4x24x8xf32> to vector<4x24x8xbf16>
    %c0_6 = arith.constant 0 : index
    %c0_7 = arith.constant 0 : index
    %c0_8 = arith.constant 0 : index
    %c0_9 = arith.constant 0 : index
    %13 = vector.load %arg5[%c0_6, %c0_7, %c0_8, %c0_9] : memref<1x4x24x8xbf16, #tpu.memory_space<vmem>>, vector<1x4x24x8xbf16>
    %14 = vector.shape_cast %13 : vector<1x4x24x8xbf16> to vector<4x24x8xbf16>
    %15 = vector.shape_cast %12 : vector<4x24x8xbf16> to vector<1x4x24x8xbf16>
    tpu.vector_store %arg5[%c0_6, %c0_7, %c0_8, %c0_9], %15 {strides = array<i32>} : memref<1x4x24x8xbf16, #tpu.memory_space<vmem>>, vector<1x4x24x8xbf16>,
    %16 = vector.extract_strided_slice %8 {offsets = [0, 32], sizes = [24, 32], strides = [1, 1]} : vector<24x64xf32> to vector<24x32xf32>
    %17 = vector.shape_cast %16 : vector<24x32xf32> to vector<24x4x8xf32>
    %18 = tpu.transpose %17, [1, 0, 2] : vector<24x4x8xf32> -> vector<4x24x8xf32>
    %19 = arith.truncf %18 : vector<4x24x8xf32> to vector<4x24x8xbf16>
    %c0_10 = arith.constant 0 : index
    %c0_11 = arith.constant 0 : index
    %c0_12 = arith.constant 0 : index
    %c0_13 = arith.constant 0 : index
    %20 = vector.load %arg6[%c0_10, %c0_11, %c0_12, %c0_13] : memref<1x4x24x8xbf16, #tpu.memory_space<vmem>>, vector<1x4x24x8xbf16>
    %21 = vector.shape_cast %20 : vector<1x4x24x8xbf16> to vector<4x24x8xbf16>
    %22 = vector.shape_cast %19 : vector<4x24x8xbf16> to vector<1x4x24x8xbf16>
    tpu.vector_store %arg6[%c0_10, %c0_11, %c0_12, %c0_13], %22 {strides = array<i32>} : memref<1x4x24x8xbf16, #tpu.memory_space<vmem>>, vector<1x4x24x8xbf16>,
    return
  }
  func.func @transform_0(%arg0: i32, %arg1: i32) -> (i32, i32, i32) {
    %c0_i32 = arith.constant 0 : i32
    %c0_i32_0 = arith.constant 0 : i32
    return %arg0, %arg1, %c0_i32 : i32, i32, i32
  }
  func.func @transform_1(%arg0: i32, %arg1: i32) -> (i32, i32) {
    %c0_i32 = arith.constant 0 : i32
    %c0_i32_0 = arith.constant 0 : i32
    %c0_i32_1 = arith.constant 0 : i32
    return %c0_i32, %c0_i32_0 : i32, i32
  }
  func.func @transform_2(%arg0: i32, %arg1: i32) -> (i32, i32) {
    %c0_i32 = arith.constant 0 : i32
    %c0_i32_0 = arith.constant 0 : i32
    %c0_i32_1 = arith.constant 0 : i32
    return %c0_i32, %c0_i32_0 : i32, i32
  }
  func.func @transform_3(%arg0: i32, %arg1: i32) -> (i32, i32, i32, i32) {
    %c0_i32 = arith.constant 0 : i32
    %c0_i32_0 = arith.constant 0 : i32
    %c0_i32_1 = arith.constant 0 : i32
    return %arg0, %c0_i32, %arg1, %c0_i32_0 : i32, i32, i32, i32
  }
  func.func @transform_4(%arg0: i32, %arg1: i32) -> (i32, i32, i32, i32) {
    %c0_i32 = arith.constant 0 : i32
    %c0_i32_0 = arith.constant 0 : i32
    %c0_i32_1 = arith.constant 0 : i32
    return %arg0, %c0_i32, %arg1, %c0_i32_0 : i32, i32, i32, i32
  }
}

</mosaic_0001>

<llo_original>
// kernel: tpu_custom_call.1
$region0: #{tpu_custom_call.1}
  #allocation0 [shape = 'u32[]', space=smem, size = 0x4, offset = 0x4, fixed_abs, tag = 'smem constant byte address 0x4 - core index']
  #allocation1 [shape = 'u32[144,128]{1,0:T(1,128)}', space=vmem, size = 0x12000, scoped, tag = 'internal scratch']
  %s0 = inlined_call_operand.hbm [shape: bf16[2,24,32], index: 0, kind: input, shape index: {}]
  %s1 = inlined_call_operand.hbm [shape: bf16[32,64], index: 1, kind: input, shape index: {}]
  %s2 = inlined_call_operand.vmem [shape: f32[1,64], index: 2, kind: input, shape index: {}]
  %s3 = inlined_call_operand.vmem [shape: bf16[2,4,24,8], index: 3, kind: output, shape index: {0}]
  %s4 = inlined_call_operand.vmem [shape: bf16[2,4,24,8], index: 4, kind: output, shape index: {1}]
  %5 = xla_tuple %s3, %s4
  %s6 = sld [smem:[#allocation0]]
  $region61: #{tpu_custom_call.1} parent=0
    _
  %s8 = ssub.s32 1, %s6
  %s9 = scalar_select 0, %s8, %s6
  $region1: #{tpu_custom_call.1} parent=0
    #allocation2 [shape = 'u8[12288]{0}', space=vmem, size = 0x3000, scoped, tag = 'input window, operand 0']
    #allocation3 [shape = 's32[2]{0}', space=sflag, size = 0x8, scoped, tag = 'scoped memory for tpu_custom_call.1']
    #allocation4 [shape = 'u8[8192]{0}', space=vmem, size = 0x2000, scoped, tag = 'input window, operand 1, single buffered']
    #allocation5 [shape = 's32[1]{0}', space=sflag, size = 0x4, scoped, tag = 'scoped memory for tpu_custom_call.1']
    %10 = vsyncpa [#allocation3], 0
    %s11 = scalar_lea.sflag [#allocation3], 1
    %12 = vsyncpa %s11, 0
    %13 = vsyncpa [#allocation5], 0
    loop: start=0, step=1, limit=4
    $region2: #{tpu_custom_call.1} parent=1 // loop_pre_header
      _
    $region3: #{tpu_custom_call.1} parent=1 // loop_header
      %s15 = sphi 0, %s19
      %p16 = scmp.ge.s32.totalorder %s15, 4
      %s22 = sphi 0, %s34
      %s23 = sphi 0, %s30
      %s24 = sphi 0, %s22
      %s25 = sphi 0, %s23
      %s26 = sphi 0, %s24
      %s27 = sphi 0, %s25
      %s39 = sphi 0, %s41
      %s42 = sphi 0, %s39
      %s43 = sphi 0, %s42
      %s59 = sphi 0, %s43
      %s63 = sphi 0, %s63
      %s65 = sphi 0, %s63
      %s66 = sphi 0, %s65
      %s80 = sphi 0, %s66
      %s84 = sphi 0, %s84
      %s86 = sphi 0, %s84
      %s87 = sphi 0, %s86
      %s101 = sphi 0, %s87
      %s109 = sphi 0, %s111
      %s112 = sphi 0, %s109
      %s113 = sphi 0, %s112
      %s129 = sphi 0, %s113
      %s137 = sphi 0, %s139
      %s140 = sphi 0, %s137
      %s141 = sphi 0, %s140
      %s157 = sphi 0, %s141
    $region4: #{tpu_custom_call.1} parent=1 // loop_header_branch
      %18 = sbr.rel (%p16) target = $region8
    $region5: #{tpu_custom_call.1} parent=1 // loop_body
      %s20 = ssub.s32 %s15, 1
      %s21 = ssub.s32 %s15, 2
      %s28 = sadd.s32 1, %s23
      %p29 = scmp.ge.s32.totalorder %s28, 1
      %s30 = scalar_select %p29, 0, %s28
      %s31 = sadd.s32 1, %s22
      %s32 = scalar_select %p29, %s31, %s22
      %p33 = scmp.ge.s32.totalorder %s32, 2
      %s34 = scalar_select %p33, 0, %s32
      %s35 = ssub.s32 %s22, %s34
      %s36 = ssub.s32 %s23, %s30
      %s37 = sor.u32 %s35, %s36
      %p38 = scmp.eq.s32.totalorder %s37, 0
      %s40 = sadd.s32 %s39, 1
      %s41 = scalar_select %p38, %s39, %s40
      %p44 = pneg %p38
      %p45 = scmp.eq.s32.totalorder %s15, 1
      %p46 = por %p44, %p45
      %p47 = scmp.ne.s32.totalorder %s39, %s42
      %p48 = scmp.eq.s32.totalorder %s15, 0
      %p49 = por %p47, %p48
      %p50 = scmp.ne.s32.totalorder %s39, %s42
      %p51 = scmp.eq.s32.totalorder %s20, 1
      %p52 = por %p50, %p51
      %p53 = scmp.ne.s32.totalorder %s42, %s43
      %p54 = scmp.eq.s32.totalorder %s20, 0
      %p55 = por %p53, %p54
      %p56 = scmp.ne.s32.totalorder %s42, %s43
      %p57 = scmp.eq.s32.totalorder %s21, 1
      %p58 = por %p56, %p57
      %p60 = scmp.ne.s32.totalorder %s43, %s59
      %p61 = scmp.eq.s32.totalorder %s21, 0
      %p62 = por %p60, %p61
      %s64 = sadd.s32 %s63, 1
      %p67 = scmp.eq.s32.totalorder %s15, 1
      %p68 = scmp.ne.s32.totalorder %s63, %s65
      %p69 = scmp.eq.s32.totalorder %s15, 0
      %p70 = por %p68, %p69
      %p71 = scmp.ne.s32.totalorder %s63, %s65
      %p72 = scmp.eq.s32.totalorder %s20, 1
      %p73 = por %p71, %p72
      %p74 = scmp.ne.s32.totalorder %s65, %s66
      %p75 = scmp.eq.s32.totalorder %s20, 0
      %p76 = por %p74, %p75
      %p77 = scmp.ne.s32.totalorder %s65, %s66
      %p78 = scmp.eq.s32.totalorder %s21, 1
      %p79 = por %p77, %p78
      %p81 = scmp.ne.s32.totalorder %s66, %s80
      %p82 = scmp.eq.s32.totalorder %s21, 0
      %p83 = por %p81, %p82
      %s85 = sadd.s32 %s84, 1
      %p88 = scmp.eq.s32.totalorder %s15, 1
      %p89 = scmp.ne.s32.totalorder %s84, %s86
      %p90 = scmp.eq.s32.totalorder %s15, 0
      %p91 = por %p89, %p90
      %p92 = scmp.ne.s32.totalorder %s84, %s86
      %p93 = scmp.eq.s32.totalorder %s20, 1
      %p94 = por %p92, %p93
      %p95 = scmp.ne.s32.totalorder %s86, %s87
      %p96 = scmp.eq.s32.totalorder %s20, 0
      %p97 = por %p95, %p96
      %p98 = scmp.ne.s32.totalorder %s86, %s87
      %p99 = scmp.eq.s32.totalorder %s21, 1
      %p100 = por %p98, %p99
      %p102 = scmp.ne.s32.totalorder %s87, %s101
      %p103 = scmp.eq.s32.totalorder %s21, 0
      %p104 = por %p102, %p103
      %s105 = ssub.s32 %s22, %s34
      %s106 = ssub.s32 %s23, %s30
      %s107 = sor.u32 %s105, %s106
      %p108 = scmp.eq.s32.totalorder %s107, 0
      %s110 = sadd.s32 %s109, 1
      %s111 = scalar_select %p108, %s109, %s110
      %p114 = pneg %p108
      %p115 = scmp.eq.s32.totalorder %s15, 1
      %p116 = por %p114, %p115
      %p117 = scmp.ne.s32.totalorder %s109, %s112
      %p118 = scmp.eq.s32.totalorder %s15, 0
      %p119 = por %p117, %p118
      %p120 = scmp.ne.s32.totalorder %s109, %s112
      %p121 = scmp.eq.s32.totalorder %s20, 1
      %p122 = por %p120, %p121
      %p123 = scmp.ne.s32.totalorder %s112, %s113
      %p124 = scmp.eq.s32.totalorder %s20, 0
      %p125 = por %p123, %p124
      %p126 = scmp.ne.s32.totalorder %s112, %s113
      %p127 = scmp.eq.s32.totalorder %s21, 1
      %p128 = por %p126, %p127
      %p130 = scmp.ne.s32.totalorder %s113, %s129
      %p131 = scmp.eq.s32.totalorder %s21, 0
      %p132 = por %p130, %p131
      %s133 = ssub.s32 %s22, %s34
      %s134 = ssub.s32 %s23, %s30
      %s135 = sor.u32 %s133, %s134
      %p136 = scmp.eq.s32.totalorder %s135, 0
      %s138 = sadd.s32 %s137, 1
      %s139 = scalar_select %p136, %s137, %s138
      %p142 = pneg %p136
      %p143 = scmp.eq.s32.totalorder %s15, 1
      %p144 = por %p142, %p143
      %p145 = scmp.ne.s32.totalorder %s137, %s140
      %p146 = scmp.eq.s32.totalorder %s15, 0
      %p147 = por %p145, %p146
      %p148 = scmp.ne.s32.totalorder %s137, %s140
      %p149 = scmp.eq.s32.totalorder %s20, 1
      %p150 = por %p148, %p149
      %p151 = scmp.ne.s32.totalorder %s140, %s141
      %p152 = scmp.eq.s32.totalorder %s20, 0
      %p153 = por %p151, %p152
      %p154 = scmp.ne.s32.totalorder %s140, %s141
      %p155 = scmp.eq.s32.totalorder %s21, 1
      %p156 = por %p154, %p155
      %p158 = scmp.ne.s32.totalorder %s141, %s157
      %p159 = scmp.eq.s32.totalorder %s21, 0
      %p160 = por %p158, %p159
      %p161 = scmp.le.s32.totalorder 1, %s15
      %p162 = scmp.lt.s32.totalorder %s15, 3
      %p163 = pnand %p161, %p162
      %p164 = pneg %p163
      // Predicated region
      $region9: #{tpu_custom_call.1} parent=5 // pred_check
        _
      $region10: #{tpu_custom_call.1} parent=5 // pred_check_branch
        %166 = sbr.rel (%p163) target = $region12
      $region11: #{tpu_custom_call.1} parent=5 // pred_region
        %s167 = ssub.s32 %s15, 1
        // Predicated region
        $region13: #{tpu_custom_call.1} parent=11 // pred_check
          %p168 = pneg %p76
        $region14: #{tpu_custom_call.1} parent=11 // pred_check_branch
          %170 = sbr.rel (%p168) target = $region16
        $region15: #{tpu_custom_call.1} parent=11 // pred_region
          %s172 = ssub.s32 256, 256
          %173 = vsyncadd [#allocation5], %s172
          %s174 = sshll.u32 [#allocation4], 4
          %s175 = int_to_ptr.vmem [resolvable:$true] %s174
          %180 = dma.hbm_to_vmem [thread:$0]  %s1, 256, %s175, [#allocation5], 64, 64, 4
        $region16: #{tpu_custom_call.1} parent=11 // pred_fallthru
          _
        // Predicated region
        $region17: #{tpu_custom_call.1} parent=11 // pred_check
          %p181 = pneg %p97
        $region18: #{tpu_custom_call.1} parent=11 // pred_check_branch
          %183 = sbr.rel (%p181) target = $region20
        $region19: #{tpu_custom_call.1} parent=11 // pred_region
          _
        $region20: #{tpu_custom_call.1} parent=11 // pred_fallthru
          _
      $region12: #{tpu_custom_call.1} parent=5 // pred_fallthru
        _
      %p184 = scmp.lt.s32.totalorder %s15, 2
      // Predicated region
      $region21: #{tpu_custom_call.1} parent=5 // pred_check
        %p185 = pneg %p184
      $region22: #{tpu_custom_call.1} parent=5 // pred_check_branch
        %187 = sbr.rel (%p185) target = $region24
      $region23: #{tpu_custom_call.1} parent=5 // pred_region
        // Predicated region
        $region25: #{tpu_custom_call.1} parent=23 // pred_check
          %p188 = pneg %p49
        $region26: #{tpu_custom_call.1} parent=23 // pred_check_branch
          %190 = sbr.rel (%p188) target = $region28
        $region27: #{tpu_custom_call.1} parent=23 // pred_region
          %s191 = sand.u32 %s39, 1
          %s192 = scalar_lea.sflag [#allocation3], %s191
          %s193 = sand.u32 %s39, 1
          %s194 = smul.addr %s193, 12
          %s195 = scalar_lea.vmem [#allocation2], %s194
          %s196 = smul.u32 3, %s23
          %s198 = ssub.s32 192, 192
          %199 = vsyncadd %s192, %s198
          %s200 = smul.addr %s22, 3
          %s201 = sadd.s32 %s196, %s200
          %s202 = smul.addr %s201, 64
          %s203 = scalar_lea.hbm %s0, %s202
          %s204 = sshll.u32 %s195, 4
          %s205 = int_to_ptr.vmem [resolvable:$true] %s204
          %210 = dma.hbm_to_vmem [thread:$0]  %s203, 192, %s205, %s192, 64, 64, 4
        $region28: #{tpu_custom_call.1} parent=23 // pred_fallthru
          _
      $region24: #{tpu_custom_call.1} parent=5 // pred_fallthru
        _
      %p211 = scmp.le.s32.totalorder 1, %s15
      %p212 = scmp.lt.s32.totalorder %s15, 3
      %p213 = pnand %p211, %p212
      %p214 = pneg %p213
      // Predicated region
      $region29: #{tpu_custom_call.1} parent=5 // pred_check
        _
      $region30: #{tpu_custom_call.1} parent=5 // pred_check_branch
        %216 = sbr.rel (%p213) target = $region32
      $region31: #{tpu_custom_call.1} parent=5 // pred_region
        %s217 = ssub.s32 %s15, 1
        %s218 = sand.u32 %s42, 1
        %s219 = scalar_lea.sflag [#allocation3], %s218
        %s220 = sand.u32 %s42, 1
        %s221 = smul.addr %s220, 12
        %s222 = scalar_lea.vmem [#allocation2], %s221
        // Predicated region
        $region33: #{tpu_custom_call.1} parent=31 // pred_check
          %p223 = pneg %p55
        $region34: #{tpu_custom_call.1} parent=31 // pred_check_branch
          %225 = sbr.rel (%p223) target = $region36
        $region35: #{tpu_custom_call.1} parent=31 // pred_region
          %226 = dma.done %s219, 192
        $region36: #{tpu_custom_call.1} parent=31 // pred_fallthru
          _
        // Predicated region
        $region37: #{tpu_custom_call.1} parent=31 // pred_check
          %p227 = pneg %p76
        $region38: #{tpu_custom_call.1} parent=31 // pred_check_branch
          %229 = sbr.rel (%p227) target = $region40
        $region39: #{tpu_custom_call.1} parent=31 // pred_region
          %230 = dma.done [#allocation5], 256
        $region40: #{tpu_custom_call.1} parent=31 // pred_fallthru
          _
        %s231 = sand.u32 %s42, 1
        %s232 = scalar_lea.sflag [#allocation3], %s231
        %s233 = sand.u32 %s42, 1
        %s234 = smul.addr %s233, 12
        %s235 = scalar_lea.vmem [#allocation2], %s234
        %p236 = pneg %p55
        %p237 = pneg %p52
        %p238 = pneg %p76
        %p239 = pneg %p73
        %p240 = pneg %p97
        %p241 = pneg %p94
        %p242 = pneg %p125
        %p243 = pneg %p122
        %s244 = smul.u32 3, %s25
        %p245 = scmp.lt.s32.totalorder %s24, 1
        %s246 = scalar_select %p245, %s24, 1
        %p247 = scmp.lt.s32.totalorder %s244, 2
        %s248 = scalar_select %p247, %s244, 2
        %s249 = smul.addr %s246, 12
        %s250 = sadd.s32 %s248, %s249
        %s251 = smul.addr %s250, 4
        %s252 = scalar_lea.vmem %s3, %s251
        %p253 = pneg %p153
        %p254 = pneg %p150
        %s255 = smul.u32 3, %s25
        %p256 = scmp.lt.s32.totalorder %s24, 1
        %s257 = scalar_select %p256, %s24, 1
        %p258 = scmp.lt.s32.totalorder %s255, 2
        %s259 = scalar_select %p258, %s255, 2
        %s260 = smul.addr %s257, 12
        %s261 = sadd.s32 %s259, %s260
        %s262 = smul.addr %s261, 4
        %s263 = scalar_lea.vmem %s4, %s262
        %s264 = smul.u32 3, %s25
        %s265 = smul.u32 3, %s25
        %p266 = scmp.lt.s32.totalorder %s24, 1
        %s267 = scalar_select %p266, %s24, 1
        %p268 = scmp.lt.s32.totalorder %s265, 2
        %s269 = scalar_select %p268, %s265, 2
        %s270 = smul.addr %s267, 12
        %s271 = sadd.s32 %s269, %s270
        %s272 = smul.addr %s271, 4
        %s273 = scalar_lea.vmem %s3, %s272
        %s274 = smul.u32 3, %s25
        %s275 = smul.u32 3, %s25
        %p276 = scmp.lt.s32.totalorder %s24, 1
        %s277 = scalar_select %p276, %s24, 1
        %p278 = scmp.lt.s32.totalorder %s275, 2
        %s279 = scalar_select %p278, %s275, 2
        %s280 = smul.addr %s277, 12
        %s281 = sadd.s32 %s279, %s280
        %s282 = smul.addr %s281, 4
        %s283 = scalar_lea.vmem %s4, %s282
        %s284 = smul.u32 3, %s25
        %v286 = vld [vmem:[%s222] sm:$0xf]
        %v287 = vld [vmem:[%s222 + $0x4] sm:$0xf]
        %v288 = vld [vmem:[%s222 + $0x8] sm:$0xf]
        %v289 = vld [vmem:[#allocation4] sm:$0xf]
        %v290 = vld [vmem:[#allocation4 + $0x4] sm:$0xf]
        %v291 = vld [vmem:[#allocation4 + $0x8] sm:$0xf]
        %v292 = vld [vmem:[#allocation4 + $0xc] sm:$0xf]
        %v293 = vld [vmem:[%s2] sm:$0x1]
        %v295 = vlaneseq
        %v296 = vshrl.u32 %v295, 7
        %v297 = vsub.s32 0, %v296
        %v298 = vrot.slane %v293, %v297
        %v303 = vunpack.c.l.b16 %v286
        %v304 = vunpack.c.l.b16 %v287
        %v305 = vunpack.c.l.b16 %v288
        %v306 = vpack.c.b16 %v304, %v303
        %v307 = vpack.c.b16 %v305, %v305
        %v312 = vunpack.c.l.b16 %v289
        %v313 = vunpack.c.l.b16 %v290
        %v314 = vunpack.c.l.b16 %v291
        %v315 = vunpack.c.l.b16 %v292
        %v316 = vpack.c.b16 %v313, %v312
        %v317 = vpack.c.b16 %v315, %v314
        %vm320 = vcmask 261120
        %v322 = vsel %vm320, %v306, 0
        %v325 = vsel %vm320, %v307, 0
        %327 = vmatprep.subr.bf16.mxu0 0
        %328 = vmatpush1.bf16.msra.mxu0 0
        %329 = vmatprep.subr.bf16.mxu0 0
        %330 = vmatpush1.bf16.msra.mxu0 0
        %331 = vmatprep.subr.bf16.mxu0 0
        %332 = vmatpush1.bf16.msra.mxu0 0
        %333 = vmatprep.subr.bf16.mxu0 0
        %334 = vmatpush1.bf16.msra.mxu0 0
        %335 = vmatprep.subr.bf16.mxu0 0
        %336 = vmatpush1.bf16.msra.mxu0 0
        %337 = vmatprep.subr.bf16.mxu0 0
        %338 = vmatpush1.bf16.msra.mxu0 0
        %339 = vmatprep.subr.bf16.mxu0 0
        %340 = vmatpush1.bf16.msra.mxu0 %v317
        %341 = vmatprep.subr.bf16.mxu0 0
        %342 = vmatpush1.bf16.msra.mxu0 %v316
        %343 = vmatprep.subr.bf16.mxu0 0
        %344 = vmatpush2.bf16.msra.mxu0 0
        %345 = vmatprep.subr.bf16.mxu0 0
        %346 = vmatpush2.bf16.msra.mxu0 0
        %347 = vmatprep.subr.bf16.mxu0 0
        %348 = vmatpush2.bf16.msra.mxu0 0
        %349 = vmatprep.subr.bf16.mxu0 0
        %350 = vmatpush2.bf16.msra.mxu0 0
        %351 = vmatprep.subr.bf16.mxu0 0
        %352 = vmatpush2.bf16.msra.mxu0 0
        %353 = vmatprep.subr.bf16.mxu0 0
        %354 = vmatpush2.bf16.msra.mxu0 0
        %355 = vmatprep.subr.bf16.mxu0 0
        %356 = vmatpush2.bf16.msra.mxu0 0
        %357 = vmatprep.subr.bf16.mxu0 0
        %358 = vmatpush2.bf16.msra.mxu0 0
        %359 = vmatprep.mubr.bf16.mxu0 0
        %360 = vmatmul.mubr.bf16.gmra.mxu0 %v322
        %v361 = vpop.f32.mrf.mxu0
        %v362 = vadd.f32 %v298, %v361
        %v363 = vpop.f32.mrf.mxu0
        %v364 = vpop.f32.mrf.mxu0
        %v365 = vadd.f32 %v298, %v364
        %v366 = vpop.f32.mrf.mxu0
        %367 = vmatprep.mubr.bf16.mxu0 0
        %368 = vmatmul.mubr.bf16.gmra.mxu0 %v325
        %v369 = vpop.f32.mrf.mxu0
        %v370 = vadd.f32 %v298, %v369
        %v371 = vpop.f32.mrf.mxu0
        %v372 = vpop.f32.mrf.mxu0
        %v373 = vpop.f32.mrf.mxu0
        %374 = vdwg.mxu0
        %378 = vrot.lane.b32.xlu0 %v362, 120
        %v379 = vpop.permute.xlu0 %378
        %380 = vrot.lane.b32.xlu0 %v365, 120
        %v381 = vpop.permute.xlu0 %380
        %382 = vrot.lane.b32.xlu0 %v370, 120
        %v383 = vpop.permute.xlu0 %382
        %387 = vrot.lane.b32.xlu0 %v362, 112
        %v388 = vpop.permute.xlu0 %387
        %389 = vrot.lane.b32.xlu0 %v365, 112
        %v390 = vpop.permute.xlu0 %389
        %391 = vrot.lane.b32.xlu0 %v370, 112
        %v392 = vpop.permute.xlu0 %391
        %396 = vrot.lane.b32.xlu0 %v362, 104
        %v397 = vpop.permute.xlu0 %396
        %398 = vrot.lane.b32.xlu0 %v365, 104
        %v399 = vpop.permute.xlu0 %398
        %400 = vrot.lane.b32.xlu0 %v370, 104
        %v401 = vpop.permute.xlu0 %400
        %v405 = vcombine.low %v362, %v388
        %v406 = vcombine.high %v362, %v388
        %v408 = vunpack.c.l.s4 1983009808
        %v409 = vunpack.c.0.s8 %v408
        %v410 = vlaneseq
        %v411 = vshrl.u32 %v410, 7
        %v412 = vsub.s32 %v409, %v411
        %v413 = vrot.slane %v405, %v412
        %v415 = vunpack.c.l.s4 1983009808
        %v416 = vunpack.c.0.s8 %v415
        %v417 = vlaneseq
        %v418 = vshrl.u32 %v417, 7
        %v419 = vsub.s32 %v416, %v418
        %v420 = vrot.slane %v406, %v419
        %v421 = vcombine.low %v379, %v397
        %v422 = vcombine.high %v379, %v397
        %v424 = vunpack.c.l.s4 1983009808
        %v425 = vunpack.c.0.s8 %v424
        %v426 = vlaneseq
        %v427 = vshrl.u32 %v426, 7
        %v428 = vsub.s32 %v425, %v427
        %v429 = vrot.slane %v421, %v428
        %v431 = vunpack.c.l.s4 1983009808
        %v432 = vunpack.c.0.s8 %v431
        %v433 = vlaneseq
        %v434 = vshrl.u32 %v433, 7
        %v435 = vsub.s32 %v432, %v434
        %v436 = vrot.slane %v422, %v435
        %v437 = vcombine.low %v413, %v429
        %v438 = vcombine.high %v413, %v429
        %v440 = vunpack.c.l.s4 1934713408
        %v441 = vunpack.c.0.s8 %v440
        %v442 = vlaneseq
        %v443 = vshrl.u32 %v442, 7
        %v444 = vsub.s32 %v441, %v443
        %v445 = vrot.slane %v437, %v444
        %v447 = vunpack.c.l.s4 1934713408
        %v448 = vunpack.c.0.s8 %v447
        %v449 = vlaneseq
        %v450 = vshrl.u32 %v449, 7
        %v451 = vsub.s32 %v448, %v450
        %v452 = vrot.slane %v438, %v451
        %v453 = vcombine.low %v420, %v436
        %v454 = vcombine.high %v420, %v436
        %v456 = vunpack.c.l.s4 1934713408
        %v457 = vunpack.c.0.s8 %v456
        %v458 = vlaneseq
        %v459 = vshrl.u32 %v458, 7
        %v460 = vsub.s32 %v457, %v459
        %v461 = vrot.slane %v453, %v460
        %v463 = vunpack.c.l.s4 1934713408
        %v464 = vunpack.c.0.s8 %v463
        %v465 = vlaneseq
        %v466 = vshrl.u32 %v465, 7
        %v467 = vsub.s32 %v464, %v466
        %v468 = vrot.slane %v454, %v467
        %v469 = vcombine.high %v445, 0.0
        %v470 = vcombine.high %v452, 0.0
        %v471 = vcombine.high %v461, 0.0
        %v472 = vcombine.high %v468, 0.0
        %v473 = vcombine.low %v365, %v390
        %v474 = vcombine.high %v365, %v390
        %v476 = vunpack.c.l.s4 1983009808
        %v477 = vunpack.c.0.s8 %v476
        %v478 = vlaneseq
        %v479 = vshrl.u32 %v478, 7
        %v480 = vsub.s32 %v477, %v479
        %v481 = vrot.slane %v473, %v480
        %v483 = vunpack.c.l.s4 1983009808
        %v484 = vunpack.c.0.s8 %v483
        %v485 = vlaneseq
        %v486 = vshrl.u32 %v485, 7
        %v487 = vsub.s32 %v484, %v486
        %v488 = vrot.slane %v474, %v487
        %v489 = vcombine.low %v381, %v399
        %v490 = vcombine.high %v381, %v399
        %v492 = vunpack.c.l.s4 1983009808
        %v493 = vunpack.c.0.s8 %v492
        %v494 = vlaneseq
        %v495 = vshrl.u32 %v494, 7
        %v496 = vsub.s32 %v493, %v495
        %v497 = vrot.slane %v489, %v496
        %v499 = vunpack.c.l.s4 1983009808
        %v500 = vunpack.c.0.s8 %v499
        %v501 = vlaneseq
        %v502 = vshrl.u32 %v501, 7
        %v503 = vsub.s32 %v500, %v502
        %v504 = vrot.slane %v490, %v503
        %v505 = vcombine.low %v481, %v497
        %v506 = vcombine.high %v481, %v497
        %v508 = vunpack.c.l.s4 1934713408
        %v509 = vunpack.c.0.s8 %v508
        %v510 = vlaneseq
        %v511 = vshrl.u32 %v510, 7
        %v512 = vsub.s32 %v509, %v511
        %v513 = vrot.slane %v505, %v512
        %v515 = vunpack.c.l.s4 1934713408
        %v516 = vunpack.c.0.s8 %v515
        %v517 = vlaneseq
        %v518 = vshrl.u32 %v517, 7
        %v519 = vsub.s32 %v516, %v518
        %v520 = vrot.slane %v506, %v519
        %v521 = vcombine.low %v488, %v504
        %v522 = vcombine.high %v488, %v504
        %v524 = vunpack.c.l.s4 1934713408
        %v525 = vunpack.c.0.s8 %v524
        %v526 = vlaneseq
        %v527 = vshrl.u32 %v526, 7
        %v528 = vsub.s32 %v525, %v527
        %v529 = vrot.slane %v521, %v528
        %v531 = vunpack.c.l.s4 1934713408
        %v532 = vunpack.c.0.s8 %v531
        %v533 = vlaneseq
        %v534 = vshrl.u32 %v533, 7
        %v535 = vsub.s32 %v532, %v534
        %v536 = vrot.slane %v522, %v535
        %v537 = vcombine.high %v513, 0.0
        %v538 = vcombine.high %v520, 0.0
        %v539 = vcombine.high %v529, 0.0
        %v540 = vcombine.high %v536, 0.0
        %v541 = vcombine.low %v370, %v392
        %v542 = vcombine.high %v370, %v392
        %v544 = vunpack.c.l.s4 1983009808
        %v545 = vunpack.c.0.s8 %v544
        %v546 = vlaneseq
        %v547 = vshrl.u32 %v546, 7
        %v548 = vsub.s32 %v545, %v547
        %v549 = vrot.slane %v541, %v548
        %v551 = vunpack.c.l.s4 1983009808
        %v552 = vunpack.c.0.s8 %v551
        %v553 = vlaneseq
        %v554 = vshrl.u32 %v553, 7
        %v555 = vsub.s32 %v552, %v554
        %v556 = vrot.slane %v542, %v555
        %v557 = vcombine.low %v383, %v401
        %v558 = vcombine.high %v383, %v401
        %v560 = vunpack.c.l.s4 1983009808
        %v561 = vunpack.c.0.s8 %v560
        %v562 = vlaneseq
        %v563 = vshrl.u32 %v562, 7
        %v564 = vsub.s32 %v561, %v563
        %v565 = vrot.slane %v557, %v564
        %v567 = vunpack.c.l.s4 1983009808
        %v568 = vunpack.c.0.s8 %v567
        %v569 = vlaneseq
        %v570 = vshrl.u32 %v569, 7
        %v571 = vsub.s32 %v568, %v570
        %v572 = vrot.slane %v558, %v571
        %v573 = vcombine.low %v549, %v565
        %v574 = vcombine.high %v549, %v565
        %v576 = vunpack.c.l.s4 1934713408
        %v577 = vunpack.c.0.s8 %v576
        %v578 = vlaneseq
        %v579 = vshrl.u32 %v578, 7
        %v580 = vsub.s32 %v577, %v579
        %v581 = vrot.slane %v573, %v580
        %v583 = vunpack.c.l.s4 1934713408
        %v584 = vunpack.c.0.s8 %v583
        %v585 = vlaneseq
        %v586 = vshrl.u32 %v585, 7
        %v587 = vsub.s32 %v584, %v586
        %v588 = vrot.slane %v574, %v587
        %v589 = vcombine.low %v556, %v572
        %v590 = vcombine.high %v556, %v572
        %v592 = vunpack.c.l.s4 1934713408
        %v593 = vunpack.c.0.s8 %v592
        %v594 = vlaneseq
        %v595 = vshrl.u32 %v594, 7
        %v596 = vsub.s32 %v593, %v595
        %v597 = vrot.slane %v589, %v596
        %v599 = vunpack.c.l.s4 1934713408
        %v600 = vunpack.c.0.s8 %v599
        %v601 = vlaneseq
        %v602 = vshrl.u32 %v601, 7
        %v603 = vsub.s32 %v600, %v602
        %v604 = vrot.slane %v590, %v603
        %v605 = vcombine.high %v581, 0.0
        %v606 = vcombine.high %v588, 0.0
        %v607 = vcombine.high %v597, 0.0
        %v608 = vcombine.high %v604, 0.0
        %v609 = vcombine.low %v445, %v452
        %v611 = vunpack.c.l.s4 1983009808
        %v612 = vunpack.c.0.s8 %v611
        %v613 = vlaneseq
        %v614 = vshrl.u32 %v613, 7
        %v615 = vsub.s32 %v612, %v614
        %v616 = vrot.slane %v609, %v615
        %v617 = vcombine.low %v469, %v470
        %v619 = vunpack.c.l.s4 1983009808
        %v620 = vunpack.c.0.s8 %v619
        %v621 = vlaneseq
        %v622 = vshrl.u32 %v621, 7
        %v623 = vsub.s32 %v620, %v622
        %v624 = vrot.slane %v617, %v623
        %v625 = vcombine.low %v461, %v468
        %v627 = vunpack.c.l.s4 1983009808
        %v628 = vunpack.c.0.s8 %v627
        %v629 = vlaneseq
        %v630 = vshrl.u32 %v629, 7
        %v631 = vsub.s32 %v628, %v630
        %v632 = vrot.slane %v625, %v631
        %v633 = vcombine.low %v471, %v472
        %v635 = vunpack.c.l.s4 1983009808
        %v636 = vunpack.c.0.s8 %v635
        %v637 = vlaneseq
        %v638 = vshrl.u32 %v637, 7
        %v639 = vsub.s32 %v636, %v638
        %v640 = vrot.slane %v633, %v639
        %v641 = vcombine.low %v616, %v624
        %v642 = vcombine.high %v616, %v624
        %v644 = vunpack.c.l.s4 1934713408
        %v645 = vunpack.c.0.s8 %v644
        %v646 = vlaneseq
        %v647 = vshrl.u32 %v646, 7
        %v648 = vsub.s32 %v645, %v647
        %v649 = vrot.slane %v641, %v648
        %v651 = vunpack.c.l.s4 1934713408
        %v652 = vunpack.c.0.s8 %v651
        %v653 = vlaneseq
        %v654 = vshrl.u32 %v653, 7
        %v655 = vsub.s32 %v652, %v654
        %v656 = vrot.slane %v642, %v655
        %v657 = vcombine.low %v632, %v640
        %v658 = vcombine.high %v632, %v640
        %v660 = vunpack.c.l.s4 1934713408
        %v661 = vunpack.c.0.s8 %v660
        %v662 = vlaneseq
        %v663 = vshrl.u32 %v662, 7
        %v664 = vsub.s32 %v661, %v663
        %v665 = vrot.slane %v657, %v664
        %v667 = vunpack.c.l.s4 1934713408
        %v668 = vunpack.c.0.s8 %v667
        %v669 = vlaneseq
        %v670 = vshrl.u32 %v669, 7
        %v671 = vsub.s32 %v668, %v670
        %v672 = vrot.slane %v658, %v671
        %v673 = vcombine.low %v649, %v665
        %v674 = vcombine.high %v649, %v665
        %v675 = vcombine.low %v656, %v672
        %v676 = vcombine.high %v656, %v672
        %v677 = vcombine.low %v513, %v520
        %v679 = vunpack.c.l.s4 1983009808
        %v680 = vunpack.c.0.s8 %v679
        %v681 = vlaneseq
        %v682 = vshrl.u32 %v681, 7
        %v683 = vsub.s32 %v680, %v682
        %v684 = vrot.slane %v677, %v683
        %v685 = vcombine.low %v537, %v538
        %v687 = vunpack.c.l.s4 1983009808
        %v688 = vunpack.c.0.s8 %v687
        %v689 = vlaneseq
        %v690 = vshrl.u32 %v689, 7
        %v691 = vsub.s32 %v688, %v690
        %v692 = vrot.slane %v685, %v691
        %v693 = vcombine.low %v529, %v536
        %v695 = vunpack.c.l.s4 1983009808
        %v696 = vunpack.c.0.s8 %v695
        %v697 = vlaneseq
        %v698 = vshrl.u32 %v697, 7
        %v699 = vsub.s32 %v696, %v698
        %v700 = vrot.slane %v693, %v699
        %v701 = vcombine.low %v539, %v540
        %v703 = vunpack.c.l.s4 1983009808
        %v704 = vunpack.c.0.s8 %v703
        %v705 = vlaneseq
        %v706 = vshrl.u32 %v705, 7
        %v707 = vsub.s32 %v704, %v706
        %v708 = vrot.slane %v701, %v707
        %v709 = vcombine.low %v684, %v692
        %v710 = vcombine.high %v684, %v692
        %v712 = vunpack.c.l.s4 1934713408
        %v713 = vunpack.c.0.s8 %v712
        %v714 = vlaneseq
        %v715 = vshrl.u32 %v714, 7
        %v716 = vsub.s32 %v713, %v715
        %v717 = vrot.slane %v709, %v716
        %v719 = vunpack.c.l.s4 1934713408
        %v720 = vunpack.c.0.s8 %v719
        %v721 = vlaneseq
        %v722 = vshrl.u32 %v721, 7
        %v723 = vsub.s32 %v720, %v722
        %v724 = vrot.slane %v710, %v723
        %v725 = vcombine.low %v700, %v708
        %v726 = vcombine.high %v700, %v708
        %v728 = vunpack.c.l.s4 1934713408
        %v729 = vunpack.c.0.s8 %v728
        %v730 = vlaneseq
        %v731 = vshrl.u32 %v730, 7
        %v732 = vsub.s32 %v729, %v731
        %v733 = vrot.slane %v725, %v732
        %v735 = vunpack.c.l.s4 1934713408
        %v736 = vunpack.c.0.s8 %v735
        %v737 = vlaneseq
        %v738 = vshrl.u32 %v737, 7
        %v739 = vsub.s32 %v736, %v738
        %v740 = vrot.slane %v726, %v739
        %v741 = vcombine.low %v717, %v733
        %v742 = vcombine.high %v717, %v733
        %v743 = vcombine.low %v724, %v740
        %v744 = vcombine.high %v724, %v740
        %v745 = vcombine.low %v581, %v588
        %v747 = vunpack.c.l.s4 1983009808
        %v748 = vunpack.c.0.s8 %v747
        %v749 = vlaneseq
        %v750 = vshrl.u32 %v749, 7
        %v751 = vsub.s32 %v748, %v750
        %v752 = vrot.slane %v745, %v751
        %v753 = vcombine.low %v605, %v606
        %v755 = vunpack.c.l.s4 1983009808
        %v756 = vunpack.c.0.s8 %v755
        %v757 = vlaneseq
        %v758 = vshrl.u32 %v757, 7
        %v759 = vsub.s32 %v756, %v758
        %v760 = vrot.slane %v753, %v759
        %v761 = vcombine.low %v597, %v604
        %v763 = vunpack.c.l.s4 1983009808
        %v764 = vunpack.c.0.s8 %v763
        %v765 = vlaneseq
        %v766 = vshrl.u32 %v765, 7
        %v767 = vsub.s32 %v764, %v766
        %v768 = vrot.slane %v761, %v767
        %v769 = vcombine.low %v607, %v608
        %v771 = vunpack.c.l.s4 1983009808
        %v772 = vunpack.c.0.s8 %v771
        %v773 = vlaneseq
        %v774 = vshrl.u32 %v773, 7
        %v775 = vsub.s32 %v772, %v774
        %v776 = vrot.slane %v769, %v775
        %v777 = vcombine.low %v752, %v760
        %v778 = vcombine.high %v752, %v760
        %v780 = vunpack.c.l.s4 1934713408
        %v781 = vunpack.c.0.s8 %v780
        %v782 = vlaneseq
        %v783 = vshrl.u32 %v782, 7
        %v784 = vsub.s32 %v781, %v783
        %v785 = vrot.slane %v777, %v784
        %v787 = vunpack.c.l.s4 1934713408
        %v788 = vunpack.c.0.s8 %v787
        %v789 = vlaneseq
        %v790 = vshrl.u32 %v789, 7
        %v791 = vsub.s32 %v788, %v790
        %v792 = vrot.slane %v778, %v791
        %v793 = vcombine.low %v768, %v776
        %v794 = vcombine.high %v768, %v776
        %v796 = vunpack.c.l.s4 1934713408
        %v797 = vunpack.c.0.s8 %v796
        %v798 = vlaneseq
        %v799 = vshrl.u32 %v798, 7
        %v800 = vsub.s32 %v797, %v799
        %v801 = vrot.slane %v793, %v800
        %v803 = vunpack.c.l.s4 1934713408
        %v804 = vunpack.c.0.s8 %v803
        %v805 = vlaneseq
        %v806 = vshrl.u32 %v805, 7
        %v807 = vsub.s32 %v804, %v806
        %v808 = vrot.slane %v794, %v807
        %v809 = vcombine.low %v785, %v801
        %v810 = vcombine.high %v785, %v801
        %v811 = vcombine.low %v792, %v808
        %v812 = vcombine.high %v792, %v808
        %v813 = vpack.c.bf16 %v741, %v673
        %v814 = vpack.c.bf16 %v809, %v809
        %v815 = vpack.c.bf16 %v742, %v674
        %v816 = vpack.c.bf16 %v810, %v810
        %v817 = vpack.c.bf16 %v743, %v675
        %v818 = vpack.c.bf16 %v811, %v811
        %v819 = vpack.c.bf16 %v744, %v676
        %v820 = vpack.c.bf16 %v812, %v812
        %v829 = vunpack.c.l.b16 %v813
        %v830 = vunpack.c.h.b16 %v813
        %v831 = vunpack.c.l.b16 %v814
        %v832 = vunpack.c.l.b16 %v815
        %v833 = vunpack.c.h.b16 %v815
        %v834 = vunpack.c.l.b16 %v816
        %v835 = vunpack.c.l.b16 %v817
        %v836 = vunpack.c.h.b16 %v817
        %v837 = vunpack.c.l.b16 %v818
        %v838 = vunpack.c.l.b16 %v819
        %v839 = vunpack.c.h.b16 %v819
        %v840 = vunpack.c.l.b16 %v820
        %v841 = vpack.c.b16 %v829, %v829
        %v842 = vpack.c.b16 %v830, %v830
        %v843 = vpack.c.b16 %v831, %v831
        %v844 = vpack.c.b16 %v832, %v832
        %v845 = vpack.c.b16 %v833, %v833
        %v846 = vpack.c.b16 %v834, %v834
        %v847 = vpack.c.b16 %v835, %v835
        %v848 = vpack.c.b16 %v836, %v836
        %v849 = vpack.c.b16 %v837, %v837
        %v850 = vpack.c.b16 %v838, %v838
        %v851 = vpack.c.b16 %v839, %v839
        %v852 = vpack.c.b16 %v840, %v840
        %vm865 = vcmask 60416
        %866 = vst.msk [vmem:[%s273] sm:$0xf] %vm865, %v841
        %867 = vst.msk [vmem:[%s273 + $0x4] sm:$0xf] %vm865, %v842
        %868 = vst.msk [vmem:[%s273 + $0x8] sm:$0xf] %vm865, %v843
        %869 = vst.msk [vmem:[%s273 + $0xc] sm:$0xf] %vm865, %v844
        %870 = vst.msk [vmem:[%s273 + $0x10] sm:$0xf] %vm865, %v845
        %871 = vst.msk [vmem:[%s273 + $0x14] sm:$0xf] %vm865, %v846
        %872 = vst.msk [vmem:[%s273 + $0x18] sm:$0xf] %vm865, %v847
        %873 = vst.msk [vmem:[%s273 + $0x1c] sm:$0xf] %vm865, %v848
        %874 = vst.msk [vmem:[%s273 + $0x20] sm:$0xf] %vm865, %v849
        %875 = vst.msk [vmem:[%s273 + $0x24] sm:$0xf] %vm865, %v850
        %876 = vst.msk [vmem:[%s273 + $0x28] sm:$0xf] %vm865, %v851
        %877 = vst.msk [vmem:[%s273 + $0x2c] sm:$0xf] %vm865, %v852
        %878 = vrot.lane.b32.xlu0 %v362, 96
        %v879 = vpop.permute.xlu0 %878
        %880 = vrot.lane.b32.xlu0 %v365, 96
        %v881 = vpop.permute.xlu0 %880
        %882 = vrot.lane.b32.xlu0 %v370, 96
        %v883 = vpop.permute.xlu0 %882
        %884 = vrot.lane.b32.xlu0 %v379, 96
        %v885 = vpop.permute.xlu0 %884
        %886 = vrot.lane.b32.xlu0 %v381, 96
        %v887 = vpop.permute.xlu0 %886
        %888 = vrot.lane.b32.xlu0 %v383, 96
        %v889 = vpop.permute.xlu0 %888
        %890 = vrot.lane.b32.xlu0 %v388, 96
        %v891 = vpop.permute.xlu0 %890
        %892 = vrot.lane.b32.xlu0 %v390, 96
        %v893 = vpop.permute.xlu0 %892
        %894 = vrot.lane.b32.xlu0 %v392, 96
        %v895 = vpop.permute.xlu0 %894
        %896 = vrot.lane.b32.xlu0 %v397, 96
        %v897 = vpop.permute.xlu0 %896
        %898 = vrot.lane.b32.xlu0 %v399, 96
        %v899 = vpop.permute.xlu0 %898
        %900 = vrot.lane.b32.xlu0 %v401, 96
        %v901 = vpop.permute.xlu0 %900
        %v914 = vcombine.low %v879, %v891
        %v915 = vcombine.high %v879, %v891
        %v917 = vunpack.c.l.s4 1983009808
        %v918 = vunpack.c.0.s8 %v917
        %v919 = vlaneseq
        %v920 = vshrl.u32 %v919, 7
        %v921 = vsub.s32 %v918, %v920
        %v922 = vrot.slane %v914, %v921
        %v924 = vunpack.c.l.s4 1983009808
        %v925 = vunpack.c.0.s8 %v924
        %v926 = vlaneseq
        %v927 = vshrl.u32 %v926, 7
        %v928 = vsub.s32 %v925, %v927
        %v929 = vrot.slane %v915, %v928
        %v930 = vcombine.low %v885, %v897
        %v931 = vcombine.high %v885, %v897
        %v933 = vunpack.c.l.s4 1983009808
        %v934 = vunpack.c.0.s8 %v933
        %v935 = vlaneseq
        %v936 = vshrl.u32 %v935, 7
        %v937 = vsub.s32 %v934, %v936
        %v938 = vrot.slane %v930, %v937
        %v940 = vunpack.c.l.s4 1983009808
        %v941 = vunpack.c.0.s8 %v940
        %v942 = vlaneseq
        %v943 = vshrl.u32 %v942, 7
        %v944 = vsub.s32 %v941, %v943
        %v945 = vrot.slane %v931, %v944
        %v946 = vcombine.low %v922, %v938
        %v947 = vcombine.high %v922, %v938
        %v949 = vunpack.c.l.s4 1934713408
        %v950 = vunpack.c.0.s8 %v949
        %v951 = vlaneseq
        %v952 = vshrl.u32 %v951, 7
        %v953 = vsub.s32 %v950, %v952
        %v954 = vrot.slane %v946, %v953
        %v956 = vunpack.c.l.s4 1934713408
        %v957 = vunpack.c.0.s8 %v956
        %v958 = vlaneseq
        %v959 = vshrl.u32 %v958, 7
        %v960 = vsub.s32 %v957, %v959
        %v961 = vrot.slane %v947, %v960
        %v962 = vcombine.low %v929, %v945
        %v963 = vcombine.high %v929, %v945
        %v965 = vunpack.c.l.s4 1934713408
        %v966 = vunpack.c.0.s8 %v965
        %v967 = vlaneseq
        %v968 = vshrl.u32 %v967, 7
        %v969 = vsub.s32 %v966, %v968
        %v970 = vrot.slane %v962, %v969
        %v972 = vunpack.c.l.s4 1934713408
        %v973 = vunpack.c.0.s8 %v972
        %v974 = vlaneseq
        %v975 = vshrl.u32 %v974, 7
        %v976 = vsub.s32 %v973, %v975
        %v977 = vrot.slane %v963, %v976
        %v978 = vcombine.high %v954, 0.0
        %v979 = vcombine.high %v961, 0.0
        %v980 = vcombine.high %v970, 0.0
        %v981 = vcombine.high %v977, 0.0
        %v982 = vcombine.low %v881, %v893
        %v983 = vcombine.high %v881, %v893
        %v985 = vunpack.c.l.s4 1983009808
        %v986 = vunpack.c.0.s8 %v985
        %v987 = vlaneseq
        %v988 = vshrl.u32 %v987, 7
        %v989 = vsub.s32 %v986, %v988
        %v990 = vrot.slane %v982, %v989
        %v992 = vunpack.c.l.s4 1983009808
        %v993 = vunpack.c.0.s8 %v992
        %v994 = vlaneseq
        %v995 = vshrl.u32 %v994, 7
        %v996 = vsub.s32 %v993, %v995
        %v997 = vrot.slane %v983, %v996
        %v998 = vcombine.low %v887, %v899
        %v999 = vcombine.high %v887, %v899
        %v1001 = vunpack.c.l.s4 1983009808
        %v1002 = vunpack.c.0.s8 %v1001
        %v1003 = vlaneseq
        %v1004 = vshrl.u32 %v1003, 7
        %v1005 = vsub.s32 %v1002, %v1004
        %v1006 = vrot.slane %v998, %v1005
        %v1008 = vunpack.c.l.s4 1983009808
        %v1009 = vunpack.c.0.s8 %v1008
        %v1010 = vlaneseq
        %v1011 = vshrl.u32 %v1010, 7
        %v1012 = vsub.s32 %v1009, %v1011
        %v1013 = vrot.slane %v999, %v1012
        %v1014 = vcombine.low %v990, %v1006
        %v1015 = vcombine.high %v990, %v1006
        %v1017 = vunpack.c.l.s4 1934713408
        %v1018 = vunpack.c.0.s8 %v1017
        %v1019 = vlaneseq
        %v1020 = vshrl.u32 %v1019, 7
        %v1021 = vsub.s32 %v1018, %v1020
        %v1022 = vrot.slane %v1014, %v1021
        %v1024 = vunpack.c.l.s4 1934713408
        %v1025 = vunpack.c.0.s8 %v1024
        %v1026 = vlaneseq
        %v1027 = vshrl.u32 %v1026, 7
        %v1028 = vsub.s32 %v1025, %v1027
        %v1029 = vrot.slane %v1015, %v1028
        %v1030 = vcombine.low %v997, %v1013
        %v1031 = vcombine.high %v997, %v1013
        %v1033 = vunpack.c.l.s4 1934713408
        %v1034 = vunpack.c.0.s8 %v1033
        %v1035 = vlaneseq
        %v1036 = vshrl.u32 %v1035, 7
        %v1037 = vsub.s32 %v1034, %v1036
        %v1038 = vrot.slane %v1030, %v1037
        %v1040 = vunpack.c.l.s4 1934713408
        %v1041 = vunpack.c.0.s8 %v1040
        %v1042 = vlaneseq
        %v1043 = vshrl.u32 %v1042, 7
        %v1044 = vsub.s32 %v1041, %v1043
        %v1045 = vrot.slane %v1031, %v1044
        %v1046 = vcombine.high %v1022, 0.0
        %v1047 = vcombine.high %v1029, 0.0
        %v1048 = vcombine.high %v1038, 0.0
        %v1049 = vcombine.high %v1045, 0.0
        %v1050 = vcombine.low %v883, %v895
        %v1051 = vcombine.high %v883, %v895
        %v1053 = vunpack.c.l.s4 1983009808
        %v1054 = vunpack.c.0.s8 %v1053
        %v1055 = vlaneseq
        %v1056 = vshrl.u32 %v1055, 7
        %v1057 = vsub.s32 %v1054, %v1056
        %v1058 = vrot.slane %v1050, %v1057
        %v1060 = vunpack.c.l.s4 1983009808
        %v1061 = vunpack.c.0.s8 %v1060
        %v1062 = vlaneseq
        %v1063 = vshrl.u32 %v1062, 7
        %v1064 = vsub.s32 %v1061, %v1063
        %v1065 = vrot.slane %v1051, %v1064
        %v1066 = vcombine.low %v889, %v901
        %v1067 = vcombine.high %v889, %v901
        %v1069 = vunpack.c.l.s4 1983009808
        %v1070 = vunpack.c.0.s8 %v1069
        %v1071 = vlaneseq
        %v1072 = vshrl.u32 %v1071, 7
        %v1073 = vsub.s32 %v1070, %v1072
        %v1074 = vrot.slane %v1066, %v1073
        %v1076 = vunpack.c.l.s4 1983009808
        %v1077 = vunpack.c.0.s8 %v1076
        %v1078 = vlaneseq
        %v1079 = vshrl.u32 %v1078, 7
        %v1080 = vsub.s32 %v1077, %v1079
        %v1081 = vrot.slane %v1067, %v1080
        %v1082 = vcombine.low %v1058, %v1074
        %v1083 = vcombine.high %v1058, %v1074
        %v1085 = vunpack.c.l.s4 1934713408
        %v1086 = vunpack.c.0.s8 %v1085
        %v1087 = vlaneseq
        %v1088 = vshrl.u32 %v1087, 7
        %v1089 = vsub.s32 %v1086, %v1088
        %v1090 = vrot.slane %v1082, %v1089
        %v1092 = vunpack.c.l.s4 1934713408
        %v1093 = vunpack.c.0.s8 %v1092
        %v1094 = vlaneseq
        %v1095 = vshrl.u32 %v1094, 7
        %v1096 = vsub.s32 %v1093, %v1095
        %v1097 = vrot.slane %v1083, %v1096
        %v1098 = vcombine.low %v1065, %v1081
        %v1099 = vcombine.high %v1065, %v1081
        %v1101 = vunpack.c.l.s4 1934713408
        %v1102 = vunpack.c.0.s8 %v1101
        %v1103 = vlaneseq
        %v1104 = vshrl.u32 %v1103, 7
        %v1105 = vsub.s32 %v1102, %v1104
        %v1106 = vrot.slane %v1098, %v1105
        %v1108 = vunpack.c.l.s4 1934713408
        %v1109 = vunpack.c.0.s8 %v1108
        %v1110 = vlaneseq
        %v1111 = vshrl.u32 %v1110, 7
        %v1112 = vsub.s32 %v1109, %v1111
        %v1113 = vrot.slane %v1099, %v1112
        %v1114 = vcombine.high %v1090, 0.0
        %v1115 = vcombine.high %v1097, 0.0
        %v1116 = vcombine.high %v1106, 0.0
        %v1117 = vcombine.high %v1113, 0.0
        %v1118 = vcombine.low %v954, %v961
        %v1120 = vunpack.c.l.s4 1983009808
        %v1121 = vunpack.c.0.s8 %v1120
        %v1122 = vlaneseq
        %v1123 = vshrl.u32 %v1122, 7
        %v1124 = vsub.s32 %v1121, %v1123
        %v1125 = vrot.slane %v1118, %v1124
        %v1126 = vcombine.low %v978, %v979
        %v1128 = vunpack.c.l.s4 1983009808
        %v1129 = vunpack.c.0.s8 %v1128
        %v1130 = vlaneseq
        %v1131 = vshrl.u32 %v1130, 7
        %v1132 = vsub.s32 %v1129, %v1131
        %v1133 = vrot.slane %v1126, %v1132
        %v1134 = vcombine.low %v970, %v977
        %v1136 = vunpack.c.l.s4 1983009808
        %v1137 = vunpack.c.0.s8 %v1136
        %v1138 = vlaneseq
        %v1139 = vshrl.u32 %v1138, 7
        %v1140 = vsub.s32 %v1137, %v1139
        %v1141 = vrot.slane %v1134, %v1140
        %v1142 = vcombine.low %v980, %v981
        %v1144 = vunpack.c.l.s4 1983009808
        %v1145 = vunpack.c.0.s8 %v1144
        %v1146 = vlaneseq
        %v1147 = vshrl.u32 %v1146, 7
        %v1148 = vsub.s32 %v1145, %v1147
        %v1149 = vrot.slane %v1142, %v1148
        %v1150 = vcombine.low %v1125, %v1133
        %v1151 = vcombine.high %v1125, %v1133
        %v1153 = vunpack.c.l.s4 1934713408
        %v1154 = vunpack.c.0.s8 %v1153
        %v1155 = vlaneseq
        %v1156 = vshrl.u32 %v1155, 7
        %v1157 = vsub.s32 %v1154, %v1156
        %v1158 = vrot.slane %v1150, %v1157
        %v1160 = vunpack.c.l.s4 1934713408
        %v1161 = vunpack.c.0.s8 %v1160
        %v1162 = vlaneseq
        %v1163 = vshrl.u32 %v1162, 7
        %v1164 = vsub.s32 %v1161, %v1163
        %v1165 = vrot.slane %v1151, %v1164
        %v1166 = vcombine.low %v1141, %v1149
        %v1167 = vcombine.high %v1141, %v1149
        %v1169 = vunpack.c.l.s4 1934713408
        %v1170 = vunpack.c.0.s8 %v1169
        %v1171 = vlaneseq
        %v1172 = vshrl.u32 %v1171, 7
        %v1173 = vsub.s32 %v1170, %v1172
        %v1174 = vrot.slane %v1166, %v1173
        %v1176 = vunpack.c.l.s4 1934713408
        %v1177 = vunpack.c.0.s8 %v1176
        %v1178 = vlaneseq
        %v1179 = vshrl.u32 %v1178, 7
        %v1180 = vsub.s32 %v1177, %v1179
        %v1181 = vrot.slane %v1167, %v1180
        %v1182 = vcombine.low %v1158, %v1174
        %v1183 = vcombine.high %v1158, %v1174
        %v1184 = vcombine.low %v1165, %v1181
        %v1185 = vcombine.high %v1165, %v1181
        %v1186 = vcombine.low %v1022, %v1029
        %v1188 = vunpack.c.l.s4 1983009808
        %v1189 = vunpack.c.0.s8 %v1188
        %v1190 = vlaneseq
        %v1191 = vshrl.u32 %v1190, 7
        %v1192 = vsub.s32 %v1189, %v1191
        %v1193 = vrot.slane %v1186, %v1192
        %v1194 = vcombine.low %v1046, %v1047
        %v1196 = vunpack.c.l.s4 1983009808
        %v1197 = vunpack.c.0.s8 %v1196
        %v1198 = vlaneseq
        %v1199 = vshrl.u32 %v1198, 7
        %v1200 = vsub.s32 %v1197, %v1199
        %v1201 = vrot.slane %v1194, %v1200
        %v1202 = vcombine.low %v1038, %v1045
        %v1204 = vunpack.c.l.s4 1983009808
        %v1205 = vunpack.c.0.s8 %v1204
        %v1206 = vlaneseq
        %v1207 = vshrl.u32 %v1206, 7
        %v1208 = vsub.s32 %v1205, %v1207
        %v1209 = vrot.slane %v1202, %v1208
        %v1210 = vcombine.low %v1048, %v1049
        %v1212 = vunpack.c.l.s4 1983009808
        %v1213 = vunpack.c.0.s8 %v1212
        %v1214 = vlaneseq
        %v1215 = vshrl.u32 %v1214, 7
        %v1216 = vsub.s32 %v1213, %v1215
        %v1217 = vrot.slane %v1210, %v1216
        %v1218 = vcombine.low %v1193, %v1201
        %v1219 = vcombine.high %v1193, %v1201
        %v1221 = vunpack.c.l.s4 1934713408
        %v1222 = vunpack.c.0.s8 %v1221
        %v1223 = vlaneseq
        %v1224 = vshrl.u32 %v1223, 7
        %v1225 = vsub.s32 %v1222, %v1224
        %v1226 = vrot.slane %v1218, %v1225
        %v1228 = vunpack.c.l.s4 1934713408
        %v1229 = vunpack.c.0.s8 %v1228
        %v1230 = vlaneseq
        %v1231 = vshrl.u32 %v1230, 7
        %v1232 = vsub.s32 %v1229, %v1231
        %v1233 = vrot.slane %v1219, %v1232
        %v1234 = vcombine.low %v1209, %v1217
        %v1235 = vcombine.high %v1209, %v1217
        %v1237 = vunpack.c.l.s4 1934713408
        %v1238 = vunpack.c.0.s8 %v1237
        %v1239 = vlaneseq
        %v1240 = vshrl.u32 %v1239, 7
        %v1241 = vsub.s32 %v1238, %v1240
        %v1242 = vrot.slane %v1234, %v1241
        %v1244 = vunpack.c.l.s4 1934713408
        %v1245 = vunpack.c.0.s8 %v1244
        %v1246 = vlaneseq
        %v1247 = vshrl.u32 %v1246, 7
        %v1248 = vsub.s32 %v1245, %v1247
        %v1249 = vrot.slane %v1235, %v1248
        %v1250 = vcombine.low %v1226, %v1242
        %v1251 = vcombine.high %v1226, %v1242
        %v1252 = vcombine.low %v1233, %v1249
        %v1253 = vcombine.high %v1233, %v1249
        %v1254 = vcombine.low %v1090, %v1097
        %v1256 = vunpack.c.l.s4 1983009808
        %v1257 = vunpack.c.0.s8 %v1256
        %v1258 = vlaneseq
        %v1259 = vshrl.u32 %v1258, 7
        %v1260 = vsub.s32 %v1257, %v1259
        %v1261 = vrot.slane %v1254, %v1260
        %v1262 = vcombine.low %v1114, %v1115
        %v1264 = vunpack.c.l.s4 1983009808
        %v1265 = vunpack.c.0.s8 %v1264
        %v1266 = vlaneseq
        %v1267 = vshrl.u32 %v1266, 7
        %v1268 = vsub.s32 %v1265, %v1267
        %v1269 = vrot.slane %v1262, %v1268
        %v1270 = vcombine.low %v1106, %v1113
        %v1272 = vunpack.c.l.s4 1983009808
        %v1273 = vunpack.c.0.s8 %v1272
        %v1274 = vlaneseq
        %v1275 = vshrl.u32 %v1274, 7
        %v1276 = vsub.s32 %v1273, %v1275
        %v1277 = vrot.slane %v1270, %v1276
        %v1278 = vcombine.low %v1116, %v1117
        %v1280 = vunpack.c.l.s4 1983009808
        %v1281 = vunpack.c.0.s8 %v1280
        %v1282 = vlaneseq
        %v1283 = vshrl.u32 %v1282, 7
        %v1284 = vsub.s32 %v1281, %v1283
        %v1285 = vrot.slane %v1278, %v1284
        %v1286 = vcombine.low %v1261, %v1269
        %v1287 = vcombine.high %v1261, %v1269
        %v1289 = vunpack.c.l.s4 1934713408
        %v1290 = vunpack.c.0.s8 %v1289
        %v1291 = vlaneseq
        %v1292 = vshrl.u32 %v1291, 7
        %v1293 = vsub.s32 %v1290, %v1292
        %v1294 = vrot.slane %v1286, %v1293
        %v1296 = vunpack.c.l.s4 1934713408
        %v1297 = vunpack.c.0.s8 %v1296
        %v1298 = vlaneseq
        %v1299 = vshrl.u32 %v1298, 7
        %v1300 = vsub.s32 %v1297, %v1299
        %v1301 = vrot.slane %v1287, %v1300
        %v1302 = vcombine.low %v1277, %v1285
        %v1303 = vcombine.high %v1277, %v1285
        %v1305 = vunpack.c.l.s4 1934713408
        %v1306 = vunpack.c.0.s8 %v1305
        %v1307 = vlaneseq
        %v1308 = vshrl.u32 %v1307, 7
        %v1309 = vsub.s32 %v1306, %v1308
        %v1310 = vrot.slane %v1302, %v1309
        %v1312 = vunpack.c.l.s4 1934713408
        %v1313 = vunpack.c.0.s8 %v1312
        %v1314 = vlaneseq
        %v1315 = vshrl.u32 %v1314, 7
        %v1316 = vsub.s32 %v1313, %v1315
        %v1317 = vrot.slane %v1303, %v1316
        %v1318 = vcombine.low %v1294, %v1310
        %v1319 = vcombine.high %v1294, %v1310
        %v1320 = vcombine.low %v1301, %v1317
        %v1321 = vcombine.high %v1301, %v1317
        %v1322 = vpack.c.bf16 %v1250, %v1182
        %v1323 = vpack.c.bf16 %v1318, %v1318
        %v1324 = vpack.c.bf16 %v1251, %v1183
        %v1325 = vpack.c.bf16 %v1319, %v1319
        %v1326 = vpack.c.bf16 %v1252, %v1184
        %v1327 = vpack.c.bf16 %v1320, %v1320
        %v1328 = vpack.c.bf16 %v1253, %v1185
        %v1329 = vpack.c.bf16 %v1321, %v1321
        %v1338 = vunpack.c.l.b16 %v1322
        %v1339 = vunpack.c.h.b16 %v1322
        %v1340 = vunpack.c.l.b16 %v1323
        %v1341 = vunpack.c.l.b16 %v1324
        %v1342 = vunpack.c.h.b16 %v1324
        %v1343 = vunpack.c.l.b16 %v1325
        %v1344 = vunpack.c.l.b16 %v1326
        %v1345 = vunpack.c.h.b16 %v1326
        %v1346 = vunpack.c.l.b16 %v1327
        %v1347 = vunpack.c.l.b16 %v1328
        %v1348 = vunpack.c.h.b16 %v1328
        %v1349 = vunpack.c.l.b16 %v1329
        %v1350 = vpack.c.b16 %v1338, %v1338
        %v1351 = vpack.c.b16 %v1339, %v1339
        %v1352 = vpack.c.b16 %v1340, %v1340
        %v1353 = vpack.c.b16 %v1341, %v1341
        %v1354 = vpack.c.b16 %v1342, %v1342
        %v1355 = vpack.c.b16 %v1343, %v1343
        %v1356 = vpack.c.b16 %v1344, %v1344
        %v1357 = vpack.c.b16 %v1345, %v1345
        %v1358 = vpack.c.b16 %v1346, %v1346
        %v1359 = vpack.c.b16 %v1347, %v1347
        %v1360 = vpack.c.b16 %v1348, %v1348
        %v1361 = vpack.c.b16 %v1349, %v1349
        %1374 = vst.msk [vmem:[%s283] sm:$0xf] %vm865, %v1350
        %1375 = vst.msk [vmem:[%s283 + $0x4] sm:$0xf] %vm865, %v1351
        %1376 = vst.msk [vmem:[%s283 + $0x8] sm:$0xf] %vm865, %v1352
        %1377 = vst.msk [vmem:[%s283 + $0xc] sm:$0xf] %vm865, %v1353
        %1378 = vst.msk [vmem:[%s283 + $0x10] sm:$0xf] %vm865, %v1354
        %1379 = vst.msk [vmem:[%s283 + $0x14] sm:$0xf] %vm865, %v1355
        %1380 = vst.msk [vmem:[%s283 + $0x18] sm:$0xf] %vm865, %v1356
        %1381 = vst.msk [vmem:[%s283 + $0x1c] sm:$0xf] %vm865, %v1357
        %1382 = vst.msk [vmem:[%s283 + $0x20] sm:$0xf] %vm865, %v1358
        %1383 = vst.msk [vmem:[%s283 + $0x24] sm:$0xf] %vm865, %v1359
        %1384 = vst.msk [vmem:[%s283 + $0x28] sm:$0xf] %vm865, %v1360
        %1385 = vst.msk [vmem:[%s283 + $0x2c] sm:$0xf] %vm865, %v1361
        %s1386 = smul.u32 3, %s25
        %p1387 = scmp.lt.s32.totalorder %s24, 1
        %s1388 = scalar_select %p1387, %s24, 1
        %p1389 = scmp.lt.s32.totalorder %s1386, 2
        %s1390 = scalar_select %p1389, %s1386, 2
        %s1391 = smul.addr %s1388, 12
        %s1392 = sadd.s32 %s1390, %s1391
        %s1393 = smul.addr %s1392, 4
        %s1394 = scalar_lea.vmem %s3, %s1393
        %s1395 = smul.u32 3, %s25
        %p1396 = scmp.lt.s32.totalorder %s24, 1
        %s1397 = scalar_select %p1396, %s24, 1
        %p1398 = scmp.lt.s32.totalorder %s1395, 2
        %s1399 = scalar_select %p1398, %s1395, 2
        %s1400 = smul.addr %s1397, 12
        %s1401 = sadd.s32 %s1399, %s1400
        %s1402 = smul.addr %s1401, 4
        %s1403 = scalar_lea.vmem %s4, %s1402
        // Predicated region
        $region41: #{tpu_custom_call.1} parent=31 // pred_check
          %p1404 = pneg %p122
        $region42: #{tpu_custom_call.1} parent=31 // pred_check_branch
          %1406 = sbr.rel (%p1404) target = $region44
        $region43: #{tpu_custom_call.1} parent=31 // pred_region
          %s1407 = smul.u32 3, %s25
        $region44: #{tpu_custom_call.1} parent=31 // pred_fallthru
          _
        // Predicated region
        $region45: #{tpu_custom_call.1} parent=31 // pred_check
          %p1408 = pneg %p150
        $region46: #{tpu_custom_call.1} parent=31 // pred_check_branch
          %1410 = sbr.rel (%p1408) target = $region48
        $region47: #{tpu_custom_call.1} parent=31 // pred_region
          %s1411 = smul.u32 3, %s25
        $region48: #{tpu_custom_call.1} parent=31 // pred_fallthru
          _
      $region32: #{tpu_custom_call.1} parent=5 // pred_fallthru
        _
      %p1412 = scmp.le.s32.totalorder 2, %s15
      // Predicated region
      $region49: #{tpu_custom_call.1} parent=5 // pred_check
        %p1413 = pneg %p1412
      $region50: #{tpu_custom_call.1} parent=5 // pred_check_branch
        %1415 = sbr.rel (%p1413) target = $region52
      $region51: #{tpu_custom_call.1} parent=5 // pred_region
        %s1416 = ssub.s32 %s15, 2
        // Predicated region
        $region53: #{tpu_custom_call.1} parent=51 // pred_check
          %p1417 = pneg %p128
        $region54: #{tpu_custom_call.1} parent=51 // pred_check_branch
          %1419 = sbr.rel (%p1417) target = $region56
        $region55: #{tpu_custom_call.1} parent=51 // pred_region
          %s1420 = smul.u32 3, %s27
          %p1421 = scmp.lt.s32.totalorder %s26, 1
          %s1422 = scalar_select %p1421, %s26, 1
          %p1423 = scmp.lt.s32.totalorder %s1420, 2
          %s1424 = scalar_select %p1423, %s1420, 2
          %s1425 = smul.addr %s1422, 12
          %s1426 = sadd.s32 %s1424, %s1425
          %s1427 = smul.addr %s1426, 4
          %s1428 = scalar_lea.vmem %s3, %s1427
        $region56: #{tpu_custom_call.1} parent=51 // pred_fallthru
          _
        // Predicated region
        $region57: #{tpu_custom_call.1} parent=51 // pred_check
          %p1429 = pneg %p156
        $region58: #{tpu_custom_call.1} parent=51 // pred_check_branch
          %1431 = sbr.rel (%p1429) target = $region60
        $region59: #{tpu_custom_call.1} parent=51 // pred_region
          %s1432 = smul.u32 3, %s27
          %p1433 = scmp.lt.s32.totalorder %s26, 1
          %s1434 = scalar_select %p1433, %s26, 1
          %p1435 = scmp.lt.s32.totalorder %s1432, 2
          %s1436 = scalar_select %p1435, %s1432, 2
          %s1437 = smul.addr %s1434, 12
          %s1438 = sadd.s32 %s1436, %s1437
          %s1439 = smul.addr %s1438, 4
          %s1440 = scalar_lea.vmem %s4, %s1439
        $region60: #{tpu_custom_call.1} parent=51 // pred_fallthru
          _
      $region52: #{tpu_custom_call.1} parent=5 // pred_fallthru
        _
    $region6: #{tpu_custom_call.1} parent=1 // loop_footer
      %s19 = sadd.s32 1, %s15
    $region7: #{tpu_custom_call.1} parent=1 // loop_footer_branch
      %14 = sbr.rel target = $region3
    $region8: #{tpu_custom_call.1} parent=1 // loop_exit
      _
    %1441 = vsyncpa [#allocation3], 1
    %s1442 = scalar_lea.sflag [#allocation3], 1
    %1443 = vsyncpa %s1442, 1
    %1444 = vsyncpa [#allocation5], 1

</llo_original>
